<compile_context>
chip_gen: v6e
topology: v6e:2x2x1
jax: 0.10.0
libtpu: 0.0.40
codegen_flags: <defaults>
</compile_context>

<pallas_src>
import functools

import jax
import jax.numpy as jnp
from jax.experimental import pallas as pl
from jax.experimental.pallas import tpu as pltpu

LN_EPS = 1e-5


def _plan_tiles(B, N, Din, Dout, x_itemsize,
                target_rows=1024, max_block_bytes=8 << 20):
    """Pick (TB, N_pad): batches merged per grid step and padded node count.

    Constraints:
      * TB divides B, and (when B >= 2) the grid keeps >= 2 steps so both v7x
        TensorCores get work under dimension_semantics=("parallel",).
      * nodes padded to the sublane tile of the MXU dtype (8 f32 / 16 bf16) so
        the in-kernel (TB, Np, *) <-> (TB*Np, *) reshapes are clean retilings.
      * per-step x+out block <= max_block_bytes so double-buffering stays far
        below the 32 MiB scoped-VMEM budget on every generation (incl. v7x).
      * prefer TB*Np a multiple of 128 (lane-dense unmasked stores), then the
        largest tile (amortizes the ~0.35us/step pipeline overhead).
    """
    sub = 16 if x_itemsize == 2 else 8
    n_pad = -(-N // sub) * sub
    best_tb, best_score = 1, None
    for tb in range(1, B + 1):
        if B % tb:
            continue
        if B >= 2 and B // tb < 2:
            continue
        rows = tb * n_pad
        block_bytes = x_itemsize * rows * Din + 4 * rows * Dout
        if block_bytes > max_block_bytes:
            continue
        if rows > max(target_rows, n_pad):
            continue
        score = (rows % 128 == 0, rows)
        if best_score is None or score > best_score:
            best_tb, best_score = tb, score
    if best_tb == 1:
        n_pad = N  # no batch merging -> no node padding needed
    return best_tb, n_pad


def _lr_sln_kernel(x_ref, w_ref, gamma_ref, beta_ref, o_ref, *, n_true):
    # x_ref:     (TB, Np, Din)  bf16/f32   TB batches of (nodes, L*C) slabs (Np >= n_true)
    # w_ref:     (Din, Dout)    resident fc1 weight.  The fc1 BIAS is elided on
    #                           purpose: LayerNorm is over the NODE axis and the
    #                           bias is constant across nodes, so the mean
    #                           subtraction below cancels it exactly.  (Only
    #                           valid for node-axis LN -- do not reuse for
    #                           feature-axis LN.)
    # gamma_ref: (Np, 1) f32    LayerNorm weight (normalized dim = nodes)
    # beta_ref:  (Np, 1) f32    LayerNorm bias
    # o_ref:     (1, Dout, TB*Np) f32  transposed, lane-dense output block
    tb, n_pad, din = x_ref.shape
    dout = w_ref.shape[1]

    # ---- MXU: one big (TB*Np, Din) @ (Din, Dout) slab, f32 accumulation.
    x2 = x_ref[...].reshape(tb * n_pad, din)
    y = jnp.dot(x2, w_ref[...], preferred_element_type=jnp.float32)
    y3 = y.reshape(tb, n_pad, dout)

    # ---- Space LayerNorm over the node axis, centered two-pass variance (f32).
    # Padded node rows are exact zeros (zero-padded x, no bias), so the sum is
    # exact with inv_n = 1/true_N; they are masked out of the variance.
    inv_n = 1.0 / n_true
    mean = jnp.sum(y3, axis=1, keepdims=True) * inv_n            # (TB,1,Dout)
    diff = y3 - mean
    if n_pad != n_true:
        row_mask = jax.lax.broadcasted_iota(jnp.int32, (1, n_pad, 1), 1) < n_true
        diff = jnp.where(row_mask, diff, 0.0)
    var = jnp.sum(diff * diff, axis=1, keepdims=True) * inv_n    # >= 0 by construction
    y_norm = diff * jax.lax.rsqrt(var + LN_EPS)
    out3 = y_norm * gamma_ref[...][None] + beta_ref[...][None]   # (TB,Np,Dout)

    # ---- XLU transpose -> lane-dense store (last dim of the block is TB*Np).
    o_ref[0] = out3.reshape(tb * n_pad, dout).T.astype(o_ref.dtype)


@functools.partial(jax.jit, static_argnums=(2, 3, 4))
def lr_sln_forward(long_history_data, params, prediction_seq_len, output_dim,
                   mxu_dtype=jnp.bfloat16):
    """long_history_data: (B, L, N, C).  Returns (B, P, N, Cout) float32."""
    W, gamma, beta = params["w"], params["gamma"], params["beta"]
    B, L, N, C = long_history_data.shape
    Din = L * C
    Dout = prediction_seq_len * output_dim
    assert W.shape == (Din, Dout)

    x_itemsize = jnp.dtype(mxu_dtype).itemsize
    TB, Np = _plan_tiles(B, N, Din, Dout, x_itemsize)
    G = B // TB

    # PyTorch glue: transpose(1,2) + reshape(b, n, -1), plus node padding and the
    # MXU-dtype cast.  Delegated to XLA but flagged fusible into the pallas_call
    # x operand (allow_input_fusion) so it need not make its own HBM round trip.
    x = jnp.transpose(long_history_data, (0, 2, 1, 3)).reshape(B, N, Din)
    if Np != N:
        x = jnp.pad(x, ((0, 0), (0, Np - N), (0, 0)))
    x = x.astype(mxu_dtype)

    gamma2 = jnp.pad(gamma.astype(jnp.float32), (0, Np - N)).reshape(Np, 1)
    beta2 = jnp.pad(beta.astype(jnp.float32), (0, Np - N)).reshape(Np, 1)

    kernel = functools.partial(_lr_sln_kernel, n_true=N)
    out = pl.pallas_call(
        kernel,
        out_shape=jax.ShapeDtypeStruct((G, Dout, TB * Np), jnp.float32),
        grid_spec=pltpu.PrefetchScalarGridSpec(
            num_scalar_prefetch=0,
            grid=(G,),
            in_specs=[
                pl.BlockSpec((TB, Np, Din), lambda i: (i, 0, 0)),   # x batch tile
                pl.BlockSpec((Din, Dout), lambda i: (0, 0)),        # resident W
                pl.BlockSpec((Np, 1), lambda i: (0, 0)),            # gamma
                pl.BlockSpec((Np, 1), lambda i: (0, 0)),            # beta
            ],
            out_specs=pl.BlockSpec((1, Dout, TB * Np), lambda i: (i, 0, 0)),
        ),
        compiler_params=pltpu.CompilerParams(
            dimension_semantics=("parallel",),
            vmem_limit_bytes=32 * 1024 * 1024,
            allow_input_fusion=[True, False, False, False],
        ),
    )(x, W.astype(mxu_dtype), gamma2, beta2)

    # (G, Dout, TB*Np) -> (B, P, N, Cout): small-output glue, fused by XLA.
    out = out.transpose(1, 0, 2).reshape(prediction_seq_len, output_dim, G, TB, Np)
    out = out.transpose(2, 3, 0, 4, 1).reshape(B, prediction_seq_len, Np, output_dim)
    return out[:, :, :N, :]


def _reference(long_history_data, params, P, Cout):
    """Pure-JAX reference mirroring the PyTorch forward exactly (incl. bias)."""
    W, b, gamma, beta = params["w"], params["b"], params["gamma"], params["beta"]
    B, L, N, C = long_history_data.shape
    x = jnp.transpose(long_history_data, (0, 2, 1, 3)).reshape(B, N, L * C)
    pred = x.astype(jnp.float32) @ W + b                # fc1 (Linear with bias)
    pred = jnp.transpose(pred, (0, 2, 1))               # (B, P*Cout, N)
    mean = pred.mean(axis=-1, keepdims=True)
    var = ((pred - mean) ** 2).mean(axis=-1, keepdims=True)
    pred = (pred - mean) / jnp.sqrt(var + LN_EPS) * gamma + beta
    pred = jnp.transpose(pred, (0, 2, 1))               # (B, N, P*Cout)
    return pred.reshape(B, N, P, Cout).transpose(0, 2, 1, 3)


def _run_case(key, B, L, N, C, P, Cout):
    Din, Dout = L * C, P * Cout
    k_x, k_w, k_b, k_g, k_beta = jax.random.split(key, 5)
    long_history = jax.random.normal(k_x, (B, L, N, C), dtype=jnp.float32)
    params = {
        "w": jax.random.normal(k_w, (Din, Dout), dtype=jnp.float32) * 0.1,
        # fc1 bias: only feeds the reference -- cancelled exactly by node-axis LN.
        "b": jax.random.normal(k_b, (Dout,), dtype=jnp.float32) * 0.1,
        "gamma": 1.0 + 0.1 * jax.random.normal(k_g, (N,), dtype=jnp.float32),
        "beta": 0.1 * jax.random.normal(k_beta, (N,), dtype=jnp.float32),
    }
    ref = _reference(long_history, params, P, Cout)

    # Exact-math path (f32 MXU inputs): tight tolerance.
    out_f32 = jax.block_until_ready(lr_sln_forward(long_history, params, P, Cout, jnp.float32))
    assert out_f32.shape == (B, P, N, Cout)
    assert jnp.allclose(out_f32, ref, atol=1e-5, rtol=1e-5)

    # Default bf16-MXU path: relaxed tolerance (bf16 inputs, f32 accumulation/LN).
    out_bf16 = jax.block_until_ready(lr_sln_forward(long_history, params, P, Cout, jnp.bfloat16))
    assert out_bf16.shape == (B, P, N, Cout)
    assert jnp.allclose(out_bf16, ref, atol=5e-2, rtol=5e-2)


if __name__ == "__main__":
    key = jax.random.PRNGKey(0)
    k1, k2 = jax.random.split(key)
    # Case 1: original small config (TB=1 path, no node padding).
    _run_case(k1, B=2, L=8, N=16, C=2, P=4, Cout=2)
    # Case 2: exercises batch merging + node padding (N=12 -> Np=16, TB=4, G=2).
    _run_case(k2, B=8, L=8, N=12, C=3, P=2, Cout=3)
    print("KERNEL_OK")
</pallas_src>

<mosaic_0001>
module attributes {stable_mosaic.version = 11 : i64} {
  func.func @_lr_sln_kernel(%arg0: i32, %arg1: memref<1x16x16xf32, #tpu.memory_space<vmem>>, %arg2: memref<16x8xf32, #tpu.memory_space<vmem>>, %arg3: memref<16x1xf32, #tpu.memory_space<vmem>>, %arg4: memref<16x1xf32, #tpu.memory_space<vmem>>, %arg5: memref<1x8x16xf32, #tpu.memory_space<vmem>>) attributes {dimension_semantics = [#tpu.dimension_semantics<parallel>], iteration_bounds = array<i64: 2>, scalar_prefetch = 0 : i64, scratch_operands = 0 : i64, tpu.core_type = #tpu.core_type<tc>, window_params = [{transform_indices = @transform_0, window_bounds = array<i64: 1, 16, 16>}, {pipeline_mode = #tpu.pipeline_mode<synchronous>, transform_indices = @transform_1, window_bounds = array<i64: 16, 8>}, {pipeline_mode = #tpu.pipeline_mode<synchronous>, transform_indices = @transform_2, window_bounds = array<i64: 16, 1>}, {pipeline_mode = #tpu.pipeline_mode<synchronous>, transform_indices = @transform_3, window_bounds = array<i64: 16, 1>}, {transform_indices = @transform_4, window_bounds = array<i64: 1, 8, 16>}]} {
    %c0 = arith.constant 0 : index
    %c0_0 = arith.constant 0 : index
    %c0_1 = arith.constant 0 : index
    %0 = vector.load %arg1[%c0, %c0_0, %c0_1] : memref<1x16x16xf32, #tpu.memory_space<vmem>>, vector<1x16x16xf32>
    %1 = vector.shape_cast %0 : vector<1x16x16xf32> to vector<16x16xf32>
    %c0_2 = arith.constant 0 : index
    %c0_3 = arith.constant 0 : index
    %2 = vector.load %arg2[%c0_2, %c0_3] : memref<16x8xf32, #tpu.memory_space<vmem>>, vector<16x8xf32>
    %cst = arith.constant dense<0.000000e+00> : vector<16x8xf32>
    %3 = tpu.matmul %1, %2, %cst {dimension_numbers = #tpu.dot_dimension_numbers<[1], [0], [0], [1], [0, 0, 1, 1], [], []>} : vector<16x16xf32>, vector<16x8xf32>, vector<16x8xf32> -> vector<16x8xf32>
    %4 = vector.shape_cast %3 : vector<16x8xf32> to vector<1x16x8xf32>
    %cst_4 = arith.constant dense<0.000000e+00> : vector<1x8xf32>
    %5 = vector.multi_reduction <add>, %4, %cst_4 [1] : vector<1x16x8xf32> to vector<1x8xf32>
    %6 = vector.shape_cast %5 : vector<1x8xf32> to vector<1x1x8xf32>
    %cst_5 = arith.constant 6.250000e-02 : f32
    %7 = vector.broadcast %cst_5 : f32 to vector<1x1x8xf32>
    %8 = arith.mulf %6, %7 : vector<1x1x8xf32>
    %9 = vector.broadcast %8 : vector<1x1x8xf32> to vector<1x16x8xf32>
    %10 = arith.subf %4, %9 : vector<1x16x8xf32>
    %11 = arith.mulf %10, %10 : vector<1x16x8xf32>
    %cst_6 = arith.constant dense<0.000000e+00> : vector<1x8xf32>
    %12 = vector.multi_reduction <add>, %11, %cst_6 [1] : vector<1x16x8xf32> to vector<1x8xf32>
    %13 = vector.shape_cast %12 : vector<1x8xf32> to vector<1x1x8xf32>
    %cst_7 = arith.constant 6.250000e-02 : f32
    %14 = vector.broadcast %cst_7 : f32 to vector<1x1x8xf32>
    %15 = arith.mulf %13, %14 : vector<1x1x8xf32>
    %cst_8 = arith.constant 9.99999974E-6 : f32
    %16 = vector.broadcast %cst_8 : f32 to vector<1x1x8xf32>
    %17 = arith.addf %15, %16 : vector<1x1x8xf32>
    %18 = math.rsqrt %17 : vector<1x1x8xf32>
    %19 = vector.broadcast %18 : vector<1x1x8xf32> to vector<1x16x8xf32>
    %20 = arith.mulf %10, %19 : vector<1x16x8xf32>
    %c0_9 = arith.constant 0 : index
    %c0_10 = arith.constant 0 : index
    %21 = vector.load %arg3[%c0_9, %c0_10] : memref<16x1xf32, #tpu.memory_space<vmem>>, vector<16x1xf32>
    %22 = vector.shape_cast %21 : vector<16x1xf32> to vector<1x16x1xf32>
    %23 = vector.broadcast %22 : vector<1x16x1xf32> to vector<1x16x8xf32>
    %24 = arith.mulf %20, %23 : vector<1x16x8xf32>
    %c0_11 = arith.constant 0 : index
    %c0_12 = arith.constant 0 : index
    %25 = vector.load %arg4[%c0_11, %c0_12] : memref<16x1xf32, #tpu.memory_space<vmem>>, vector<16x1xf32>
    %26 = vector.shape_cast %25 : vector<16x1xf32> to vector<1x16x1xf32>
    %27 = vector.broadcast %26 : vector<1x16x1xf32> to vector<1x16x8xf32>
    %28 = arith.addf %24, %27 : vector<1x16x8xf32>
    %29 = vector.shape_cast %28 : vector<1x16x8xf32> to vector<16x8xf32>
    %30 = tpu.transpose %29, [1, 0] : vector<16x8xf32> -> vector<8x16xf32>
    %c0_13 = arith.constant 0 : index
    %c0_14 = arith.constant 0 : index
    %c0_15 = arith.constant 0 : index
    %31 = vector.load %arg5[%c0_13, %c0_14, %c0_15] : memref<1x8x16xf32, #tpu.memory_space<vmem>>, vector<1x8x16xf32>
    %32 = vector.shape_cast %31 : vector<1x8x16xf32> to vector<8x16xf32>
    %33 = vector.shape_cast %30 : vector<8x16xf32> to vector<1x8x16xf32>
    tpu.vector_store %arg5[%c0_13, %c0_14, %c0_15], %33 {strides = array<i32>} : memref<1x8x16xf32, #tpu.memory_space<vmem>>, vector<1x8x16xf32>,
    return
  }
  func.func @transform_0(%arg0: i32) -> (i32, i32, i32) {
    %c0_i32 = arith.constant 0 : i32
    %c0_i32_0 = arith.constant 0 : i32
    %c0_i32_1 = arith.constant 0 : i32
    return %arg0, %c0_i32, %c0_i32_0 : i32, i32, i32
  }
  func.func @transform_1(%arg0: i32) -> (i32, i32) {
    %c0_i32 = arith.constant 0 : i32
    %c0_i32_0 = arith.constant 0 : i32
    %c0_i32_1 = arith.constant 0 : i32
    return %c0_i32, %c0_i32_0 : i32, i32
  }
  func.func @transform_2(%arg0: i32) -> (i32, i32) {
    %c0_i32 = arith.constant 0 : i32
    %c0_i32_0 = arith.constant 0 : i32
    %c0_i32_1 = arith.constant 0 : i32
    return %c0_i32, %c0_i32_0 : i32, i32
  }
  func.func @transform_3(%arg0: i32) -> (i32, i32) {
    %c0_i32 = arith.constant 0 : i32
    %c0_i32_0 = arith.constant 0 : i32
    %c0_i32_1 = arith.constant 0 : i32
    return %c0_i32, %c0_i32_0 : i32, i32
  }
  func.func @transform_4(%arg0: i32) -> (i32, i32, i32) {
    %c0_i32 = arith.constant 0 : i32
    %c0_i32_0 = arith.constant 0 : i32
    %c0_i32_1 = arith.constant 0 : i32
    return %arg0, %c0_i32, %c0_i32_0 : i32, i32, i32
  }
}

</mosaic_0001>

<llo_original>
// kernel: lr_sln_forward.1
$region0: #{lr_sln_forward.1}
  #allocation0 [shape = 'u32[]', space=smem, size = 0x4, offset = 0x4, fixed_abs, tag = 'smem constant byte address 0x4 - core index']
  #allocation1 [shape = 'u32[144,128]{1,0:T(1,128)}', space=vmem, size = 0x12000, scoped, tag = 'internal scratch']
  %s0 = inlined_call_operand.vmem [shape: f32[2,16,16], index: 0, kind: input, shape index: {}]
  %s1 = inlined_call_operand.vmem [shape: f32[16,8], index: 1, kind: input, shape index: {}]
  %s2 = inlined_call_operand.vmem [shape: f32[16,1], index: 2, kind: input, shape index: {}]
  %s3 = inlined_call_operand.vmem [shape: f32[16,1], index: 3, kind: input, shape index: {}]
  %s4 = inlined_call_operand.hbm [shape: f32[2,8,16], index: 4, kind: output, shape index: {}]
  %s5 = sld [smem:[#allocation0]]
  $region49: #{lr_sln_forward.1} parent=0
    _
  %s7 = ssub.s32 1, %s5
  %s8 = scalar_select 0, %s7, %s5
  $region1: #{lr_sln_forward.1} parent=0
    #allocation2 [shape = 'u8[8192]{0}', space=vmem, size = 0x2000, scoped, tag = 'output window, operand 0']
    #allocation3 [shape = 's32[2]{0}', space=sflag, size = 0x8, scoped, tag = 'scoped memory for lr_sln_forward.1']
    %9 = vsyncpa [#allocation3], 0
    %s10 = scalar_lea.sflag [#allocation3], 1
    %11 = vsyncpa %s10, 0
    loop: start=0, step=1, limit=4
    $region2: #{lr_sln_forward.1} parent=1 // loop_pre_header
      _
    $region3: #{lr_sln_forward.1} parent=1 // loop_header
      %s13 = sphi 0, %s17
      %p14 = scmp.ge.s32.totalorder %s13, 4
      %s23 = sphi 0, %s25
      %s26 = sphi 0, %s23
      %s27 = sphi 0, %s26
      %s43 = sphi 0, %s27
      %s47 = sphi 0, %s47
      %s49 = sphi 0, %s47
      %s50 = sphi 0, %s49
      %s64 = sphi 0, %s50
      %s68 = sphi 0, %s68
      %s70 = sphi 0, %s68
      %s71 = sphi 0, %s70
      %s85 = sphi 0, %s71
      %s89 = sphi 0, %s89
      %s91 = sphi 0, %s89
      %s92 = sphi 0, %s91
      %s106 = sphi 0, %s92
      %s112 = sphi 0, %s114
      %s115 = sphi 0, %s112
      %s116 = sphi 0, %s115
      %s132 = sphi 0, %s116
    $region4: #{lr_sln_forward.1} parent=1 // loop_header_branch
      %16 = sbr.rel (%p14) target = $region8
    $region5: #{lr_sln_forward.1} parent=1 // loop_body
      %s18 = ssub.s32 %s13, 1
      %s19 = ssub.s32 %s13, 2
      %s20 = sadd.s32 %s13, 1
      %s21 = ssub.s32 %s13, %s20
      %p22 = scmp.eq.s32.totalorder %s21, 0
      %s24 = sadd.s32 %s23, 1
      %s25 = scalar_select %p22, %s23, %s24
      %p28 = pneg %p22
      %p29 = scmp.eq.s32.totalorder %s13, 1
      %p30 = por %p28, %p29
      %p31 = scmp.ne.s32.totalorder %s23, %s26
      %p32 = scmp.eq.s32.totalorder %s13, 0
      %p33 = por %p31, %p32
      %p34 = scmp.ne.s32.totalorder %s23, %s26
      %p35 = scmp.eq.s32.totalorder %s18, 1
      %p36 = por %p34, %p35
      %p37 = scmp.ne.s32.totalorder %s26, %s27
      %p38 = scmp.eq.s32.totalorder %s18, 0
      %p39 = por %p37, %p38
      %p40 = scmp.ne.s32.totalorder %s26, %s27
      %p41 = scmp.eq.s32.totalorder %s19, 1
      %p42 = por %p40, %p41
      %p44 = scmp.ne.s32.totalorder %s27, %s43
      %p45 = scmp.eq.s32.totalorder %s19, 0
      %p46 = por %p44, %p45
      %s48 = sadd.s32 %s47, 1
      %p51 = scmp.eq.s32.totalorder %s13, 1
      %p52 = scmp.ne.s32.totalorder %s47, %s49
      %p53 = scmp.eq.s32.totalorder %s13, 0
      %p54 = por %p52, %p53
      %p55 = scmp.ne.s32.totalorder %s47, %s49
      %p56 = scmp.eq.s32.totalorder %s18, 1
      %p57 = por %p55, %p56
      %p58 = scmp.ne.s32.totalorder %s49, %s50
      %p59 = scmp.eq.s32.totalorder %s18, 0
      %p60 = por %p58, %p59
      %p61 = scmp.ne.s32.totalorder %s49, %s50
      %p62 = scmp.eq.s32.totalorder %s19, 1
      %p63 = por %p61, %p62
      %p65 = scmp.ne.s32.totalorder %s50, %s64
      %p66 = scmp.eq.s32.totalorder %s19, 0
      %p67 = por %p65, %p66
      %s69 = sadd.s32 %s68, 1
      %p72 = scmp.eq.s32.totalorder %s13, 1
      %p73 = scmp.ne.s32.totalorder %s68, %s70
      %p74 = scmp.eq.s32.totalorder %s13, 0
      %p75 = por %p73, %p74
      %p76 = scmp.ne.s32.totalorder %s68, %s70
      %p77 = scmp.eq.s32.totalorder %s18, 1
      %p78 = por %p76, %p77
      %p79 = scmp.ne.s32.totalorder %s70, %s71
      %p80 = scmp.eq.s32.totalorder %s18, 0
      %p81 = por %p79, %p80
      %p82 = scmp.ne.s32.totalorder %s70, %s71
      %p83 = scmp.eq.s32.totalorder %s19, 1
      %p84 = por %p82, %p83
      %p86 = scmp.ne.s32.totalorder %s71, %s85
      %p87 = scmp.eq.s32.totalorder %s19, 0
      %p88 = por %p86, %p87
      %s90 = sadd.s32 %s89, 1
      %p93 = scmp.eq.s32.totalorder %s13, 1
      %p94 = scmp.ne.s32.totalorder %s89, %s91
      %p95 = scmp.eq.s32.totalorder %s13, 0
      %p96 = por %p94, %p95
      %p97 = scmp.ne.s32.totalorder %s89, %s91
      %p98 = scmp.eq.s32.totalorder %s18, 1
      %p99 = por %p97, %p98
      %p100 = scmp.ne.s32.totalorder %s91, %s92
      %p101 = scmp.eq.s32.totalorder %s18, 0
      %p102 = por %p100, %p101
      %p103 = scmp.ne.s32.totalorder %s91, %s92
      %p104 = scmp.eq.s32.totalorder %s19, 1
      %p105 = por %p103, %p104
      %p107 = scmp.ne.s32.totalorder %s92, %s106
      %p108 = scmp.eq.s32.totalorder %s19, 0
      %p109 = por %p107, %p108
      %s110 = ssub.s32 %s13, %s20
      %p111 = scmp.eq.s32.totalorder %s110, 0
      %s113 = sadd.s32 %s112, 1
      %s114 = scalar_select %p111, %s112, %s113
      %p117 = pneg %p111
      %p118 = scmp.eq.s32.totalorder %s13, 1
      %p119 = por %p117, %p118
      %p120 = scmp.ne.s32.totalorder %s112, %s115
      %p121 = scmp.eq.s32.totalorder %s13, 0
      %p122 = por %p120, %p121
      %p123 = scmp.ne.s32.totalorder %s112, %s115
      %p124 = scmp.eq.s32.totalorder %s18, 1
      %p125 = por %p123, %p124
      %p126 = scmp.ne.s32.totalorder %s115, %s116
      %p127 = scmp.eq.s32.totalorder %s18, 0
      %p128 = por %p126, %p127
      %p129 = scmp.ne.s32.totalorder %s115, %s116
      %p130 = scmp.eq.s32.totalorder %s19, 1
      %p131 = por %p129, %p130
      %p133 = scmp.ne.s32.totalorder %s116, %s132
      %p134 = scmp.eq.s32.totalorder %s19, 0
      %p135 = por %p133, %p134
      %p136 = scmp.le.s32.totalorder 1, %s13
      %p137 = scmp.lt.s32.totalorder %s13, 3
      %p138 = pnand %p136, %p137
      %p139 = pneg %p138
      // Predicated region
      $region9: #{lr_sln_forward.1} parent=5 // pred_check
        _
      $region10: #{lr_sln_forward.1} parent=5 // pred_check_branch
        %141 = sbr.rel (%p138) target = $region12
      $region11: #{lr_sln_forward.1} parent=5 // pred_region
        %s142 = ssub.s32 %s13, 1
        // Predicated region
        $region13: #{lr_sln_forward.1} parent=11 // pred_check
          %p143 = pneg %p60
        $region14: #{lr_sln_forward.1} parent=11 // pred_check_branch
          %145 = sbr.rel (%p143) target = $region16
        $region15: #{lr_sln_forward.1} parent=11 // pred_region
          _
        $region16: #{lr_sln_forward.1} parent=11 // pred_fallthru
          _
        // Predicated region
        $region17: #{lr_sln_forward.1} parent=11 // pred_check
          %p146 = pneg %p81
        $region18: #{lr_sln_forward.1} parent=11 // pred_check_branch
          %148 = sbr.rel (%p146) target = $region20
        $region19: #{lr_sln_forward.1} parent=11 // pred_region
          _
        $region20: #{lr_sln_forward.1} parent=11 // pred_fallthru
          _
        // Predicated region
        $region21: #{lr_sln_forward.1} parent=11 // pred_check
          %p149 = pneg %p102
        $region22: #{lr_sln_forward.1} parent=11 // pred_check_branch
          %151 = sbr.rel (%p149) target = $region24
        $region23: #{lr_sln_forward.1} parent=11 // pred_region
          _
        $region24: #{lr_sln_forward.1} parent=11 // pred_fallthru
          _
      $region12: #{lr_sln_forward.1} parent=5 // pred_fallthru
        _
      %p152 = scmp.lt.s32.totalorder %s13, 2
      // Predicated region
      $region25: #{lr_sln_forward.1} parent=5 // pred_check
        %p153 = pneg %p152
      $region26: #{lr_sln_forward.1} parent=5 // pred_check_branch
        %155 = sbr.rel (%p153) target = $region28
      $region27: #{lr_sln_forward.1} parent=5 // pred_region
        // Predicated region
        $region29: #{lr_sln_forward.1} parent=27 // pred_check
          %p156 = pneg %p33
        $region30: #{lr_sln_forward.1} parent=27 // pred_check_branch
          %158 = sbr.rel (%p156) target = $region32
        $region31: #{lr_sln_forward.1} parent=27 // pred_region
          %p159 = scmp.lt.s32.totalorder %s13, 1
          %s160 = scalar_select %p159, %s13, 1
          %s161 = smul.addr %s160, 2
          %s162 = smul.addr %s161, 8
          %s163 = scalar_lea.vmem %s0, %s162
        $region32: #{lr_sln_forward.1} parent=27 // pred_fallthru
          _
      $region28: #{lr_sln_forward.1} parent=5 // pred_fallthru
        _
      %p164 = scmp.le.s32.totalorder 1, %s13
      %p165 = scmp.lt.s32.totalorder %s13, 3
      %p166 = pnand %p164, %p165
      %p167 = pneg %p166
      // Predicated region
      $region33: #{lr_sln_forward.1} parent=5 // pred_check
        _
      $region34: #{lr_sln_forward.1} parent=5 // pred_check_branch
        %169 = sbr.rel (%p166) target = $region36
      $region35: #{lr_sln_forward.1} parent=5 // pred_region
        %s170 = ssub.s32 %s13, 1
        %p171 = scmp.lt.s32.totalorder %s18, 1
        %s172 = scalar_select %p171, %s18, 1
        %s173 = smul.addr %s172, 2
        %s174 = smul.addr %s173, 8
        %s175 = scalar_lea.vmem %s0, %s174
        %p176 = pneg %p39
        %p177 = pneg %p36
        %p178 = pneg %p60
        %p179 = pneg %p57
        %p180 = pneg %p81
        %p181 = pneg %p78
        %p182 = pneg %p102
        %p183 = pneg %p99
        %p184 = pneg %p128
        %p185 = pneg %p125
        %s186 = sand.u32 %s115, 1
        %s187 = scalar_lea.sflag [#allocation3], %s186
        %s188 = sand.u32 %s115, 1
        %s189 = smul.addr %s188, 8
        %s190 = scalar_lea.vmem [#allocation2], %s189
        %p191 = scmp.lt.s32.totalorder %s18, 1
        %s192 = scalar_select %p191, %s18, 1
        %s193 = smul.addr %s192, 2
        %s194 = smul.addr %s193, 8
        %s195 = scalar_lea.vmem %s0, %s194
        %v196 = vld [vmem:[%s195] sm:$0xff]
        %v197 = vld [vmem:[%s195 + $0x8] sm:$0xff]
        %v198 = vld [vmem:[%s1] sm:$0xff]
        %v199 = vld [vmem:[%s1 + $0x8] sm:$0xff]
        %vm200 = vcmask 130048
        %v202 = vsel %vm200, %v196, 0
        %v205 = vsel %vm200, %v197, 0
        %207 = vmatprep.subr.mxu0 0.0
        %208 = vmatpush1.msra.mxu0 0.0
        %209 = vmatprep.subr.mxu0 0.0
        %210 = vmatpush1.msra.mxu0 0.0
        %211 = vmatprep.subr.mxu0 0.0
        %212 = vmatpush1.msra.mxu0 0.0
        %213 = vmatprep.subr.mxu0 0.0
        %214 = vmatpush1.msra.mxu0 0.0
        %215 = vmatprep.subr.mxu0 0.0
        %216 = vmatpush1.msra.mxu0 0.0
        %217 = vmatprep.subr.mxu0 0.0
        %218 = vmatpush1.msra.mxu0 0.0
        %219 = vmatprep.subr.mxu0 0.0
        %220 = vmatpush1.msra.mxu0 0.0
        %221 = vmatprep.subr.mxu0 0.0
        %222 = vmatpush1.msra.mxu0 0.0
        %223 = vmatprep.subr.mxu0 0.0
        %224 = vmatpush1.msra.mxu0 0.0
        %225 = vmatprep.subr.mxu0 0.0
        %226 = vmatpush1.msra.mxu0 0.0
        %227 = vmatprep.subr.mxu0 0.0
        %228 = vmatpush1.msra.mxu0 0.0
        %229 = vmatprep.subr.mxu0 0.0
        %230 = vmatpush1.msra.mxu0 0.0
        %231 = vmatprep.subr.mxu0 0.0
        %232 = vmatpush1.msra.mxu0 0.0
        %233 = vmatprep.subr.mxu0 0.0
        %234 = vmatpush1.msra.mxu0 0.0
        %235 = vmatprep.subr.mxu0 0.0
        %236 = vmatpush1.msra.mxu0 %v199
        %237 = vmatprep.subr.mxu0 0.0
        %238 = vmatpush1.msra.mxu0 %v198
        %239 = vmatprep.subr.mxu0 0.0
        %240 = vmatpush2.msra.mxu0 0.0
        %241 = vmatprep.subr.mxu0 0.0
        %242 = vmatpush2.msra.mxu0 0.0
        %243 = vmatprep.subr.mxu0 0.0
        %244 = vmatpush2.msra.mxu0 0.0
        %245 = vmatprep.subr.mxu0 0.0
        %246 = vmatpush2.msra.mxu0 0.0
        %247 = vmatprep.subr.mxu0 0.0
        %248 = vmatpush2.msra.mxu0 0.0
        %249 = vmatprep.subr.mxu0 0.0
        %250 = vmatpush2.msra.mxu0 0.0
        %251 = vmatprep.subr.mxu0 0.0
        %252 = vmatpush2.msra.mxu0 0.0
        %253 = vmatprep.subr.mxu0 0.0
        %254 = vmatpush2.msra.mxu0 0.0
        %255 = vmatprep.subr.mxu0 0.0
        %256 = vmatpush2.msra.mxu0 0.0
        %257 = vmatprep.subr.mxu0 0.0
        %258 = vmatpush2.msra.mxu0 0.0
        %259 = vmatprep.subr.mxu0 0.0
        %260 = vmatpush2.msra.mxu0 0.0
        %261 = vmatprep.subr.mxu0 0.0
        %262 = vmatpush2.msra.mxu0 0.0
        %263 = vmatprep.subr.mxu0 0.0
        %264 = vmatpush2.msra.mxu0 0.0
        %265 = vmatprep.subr.mxu0 0.0
        %266 = vmatpush2.msra.mxu0 0.0
        %267 = vmatprep.subr.mxu0 0.0
        %268 = vmatpush2.msra.mxu0 0.0
        %269 = vmatprep.subr.mxu0 0.0
        %270 = vmatpush2.msra.mxu0 0.0
        %271 = vmatprep.mubr.f32.mxu0 0.0
        %272 = vmatmul.mubr.f32.gmra.mxu0 %v202
        %v273 = vpop.f32.mrf.mxu0
        %v274 = vadd.f32 0.0, %v273
        %v275 = vpop.f32.mrf.mxu0
        %276 = vmatprep.mubr.f32.mxu0 0.0
        %277 = vmatmul.mubr.f32.gmra.mxu0 %v205
        %v278 = vpop.f32.mrf.mxu0
        %v279 = vadd.f32 0.0, %v278
        %v280 = vpop.f32.mrf.mxu0
        %281 = vdwg.mxu0
        %vm282 = vcmask 64512
        %v283 = vsel %vm282, %v274, 0.0
        %v284 = vsel %vm282, %v279, 0.0
        %v285 = vadd.f32 %v283, %v284
        %v286 = vrot.slane %v285, 4
        %v287 = vadd.f32 %v285, %v286
        %v288 = vrot.slane %v287, 2
        %v289 = vadd.f32 %v287, %v288
        %v290 = vrot.slane %v289, 1
        %v291 = vadd.f32 %v289, %v290
        %v292 = vmul.f32 %v291, 0.0625
        %v293 = vsub.f32 %v274, %v292
        %v294 = vsub.f32 %v279, %v292
        %v295 = vmul.f32 %v293, %v293
        %v296 = vmul.f32 %v294, %v294
        %v297 = vsel %vm282, %v295, 0.0
        %v298 = vsel %vm282, %v296, 0.0
        %v299 = vadd.f32 %v297, %v298
        %v300 = vrot.slane %v299, 4
        %v301 = vadd.f32 %v299, %v300
        %v302 = vrot.slane %v301, 2
        %v303 = vadd.f32 %v301, %v302
        %v304 = vrot.slane %v303, 1
        %v305 = vadd.f32 %v303, %v304
        %v306 = vmul.f32 %v305, 0.0625
        %v307 = vadd.f32 %v306, 1e-05
        %v308 = vrsqrt.pop %v307
        %v309 = vmul.f32 %v293, %v308
        %v310 = vmul.f32 %v294, %v308
        %v311 = vld [vmem:[%s2] sm:$0xff]
        %v312 = vld [vmem:[%s2 + $0x8] sm:$0xff]
        %314 = vset.pattern.permute.xlu0 0
        %315 = vperm.xlu0 %314, %v311
        %v316 = vpop.permute.xlu0 %315
        %319 = vset.pattern.permute.xlu0 0
        %320 = vperm.xlu0 %319, %v312
        %v321 = vpop.permute.xlu0 %320
        %v323 = vmul.f32 %v309, %v316
        %v324 = vmul.f32 %v310, %v321
        %v325 = vld [vmem:[%s3] sm:$0xff]
        %v326 = vld [vmem:[%s3 + $0x8] sm:$0xff]
        %328 = vset.pattern.permute.xlu0 0
        %329 = vperm.xlu0 %328, %v325
        %v330 = vpop.permute.xlu0 %329
        %333 = vset.pattern.permute.xlu0 0
        %334 = vperm.xlu0 %333, %v326
        %v335 = vpop.permute.xlu0 %334
        %v337 = vadd.f32 %v323, %v330
        %v338 = vadd.f32 %v324, %v335
        %339 = vxpose.xlu0.b32.start [1/16] %v337, 128
        %340 = vxpose.xlu0.b32.cont [2/16] %v338, 128
        %341 = vxpose.xlu0.b32.cont [3/16] 0.0, 128
        %342 = vxpose.xlu0.b32.cont [4/16] 0.0, 128
        %343 = vxpose.xlu0.b32.cont [5/16] 0.0, 128
        %344 = vxpose.xlu0.b32.cont [6/16] 0.0, 128
        %345 = vxpose.xlu0.b32.cont [7/16] 0.0, 128
        %346 = vxpose.xlu0.b32.cont [8/16] 0.0, 128
        %347 = vxpose.xlu0.b32.cont [9/16] 0.0, 128
        %348 = vxpose.xlu0.b32.cont [10/16] 0.0, 128
        %349 = vxpose.xlu0.b32.cont [11/16] 0.0, 128
        %350 = vxpose.xlu0.b32.cont [12/16] 0.0, 128
        %351 = vxpose.xlu0.b32.cont [13/16] 0.0, 128
        %352 = vxpose.xlu0.b32.cont [14/16] 0.0, 128
        %353 = vxpose.xlu0.b32.cont [15/16] 0.0, 128
        %354 = vxpose.xlu0.b32.end [16/16] 0.0, 128
        %v355 = vpop.trf.xlu0
        %v356 = vpop.trf.xlu0
        %v357 = vpop.trf.xlu0
        %v358 = vpop.trf.xlu0
        %v359 = vpop.trf.xlu0
        %v360 = vpop.trf.xlu0
        %v361 = vpop.trf.xlu0
        %v362 = vpop.trf.xlu0
        %v363 = vpop.trf.xlu0
        %v364 = vpop.trf.xlu0
        %v365 = vpop.trf.xlu0
        %v366 = vpop.trf.xlu0
        %v367 = vpop.trf.xlu0
        %v368 = vpop.trf.xlu0
        %v369 = vpop.trf.xlu0
        %v370 = vpop.trf.xlu0
        %371 = vst.msk [vmem:[%s190] sm:$0xff] %vm200, %v355
        %s372 = sand.u32 %s115, 1
        %s373 = scalar_lea.sflag [#allocation3], %s372
        %s374 = sand.u32 %s115, 1
        %s375 = smul.addr %s374, 8
        %s376 = scalar_lea.vmem [#allocation2], %s375
        // Predicated region
        $region37: #{lr_sln_forward.1} parent=35 // pred_check
          %p377 = pneg %p125
        $region38: #{lr_sln_forward.1} parent=35 // pred_check_branch
          %379 = sbr.rel (%p377) target = $region40
        $region39: #{lr_sln_forward.1} parent=35 // pred_region
          %s381 = ssub.s32 128, 128
          %382 = vsyncadd %s373, %s381
          %s383 = smul.addr %s18, 128
          %s384 = scalar_lea.hbm %s4, %s383
          %s386 = sshll.u32 %s376, 4
          %s387 = int_to_ptr.vmem [resolvable:$true] %s386
          %389 = dma.vmem_to_hbm [thread:$0]  %s387, 128, %s384, %s373
        $region40: #{lr_sln_forward.1} parent=35 // pred_fallthru
          _
      $region36: #{lr_sln_forward.1} parent=5 // pred_fallthru
        _
      %p390 = scmp.le.s32.totalorder 2, %s13
      // Predicated region
      $region41: #{lr_sln_forward.1} parent=5 // pred_check
        %p391 = pneg %p390
      $region42: #{lr_sln_forward.1} parent=5 // pred_check_branch
        %393 = sbr.rel (%p391) target = $region44
      $region43: #{lr_sln_forward.1} parent=5 // pred_region
        %s394 = ssub.s32 %s13, 2
        // Predicated region
        $region45: #{lr_sln_forward.1} parent=43 // pred_check
          %p395 = pneg %p131
        $region46: #{lr_sln_forward.1} parent=43 // pred_check_branch
          %397 = sbr.rel (%p395) target = $region48
        $region47: #{lr_sln_forward.1} parent=43 // pred_region
          %s398 = sand.u32 %s116, 1
          %s399 = scalar_lea.sflag [#allocation3], %s398
          %s400 = sand.u32 %s116, 1
          %s401 = smul.addr %s400, 8
          %s402 = scalar_lea.vmem [#allocation2], %s401
          %403 = dma.done %s399, 128
        $region48: #{lr_sln_forward.1} parent=43 // pred_fallthru
          _
      $region44: #{lr_sln_forward.1} parent=5 // pred_fallthru
        _
    $region6: #{lr_sln_forward.1} parent=1 // loop_footer
      %s17 = sadd.s32 1, %s13
    $region7: #{lr_sln_forward.1} parent=1 // loop_footer_branch
      %12 = sbr.rel target = $region3
    $region8: #{lr_sln_forward.1} parent=1 // loop_exit
      _
    %404 = vsyncpa [#allocation3], 1
    %s405 = scalar_lea.sflag [#allocation3], 1
    %406 = vsyncpa %s405, 1

</llo_original>
